<compile_context>
chip_gen: v6e
topology: v6e:2x2x1
jax: 0.10.0
libtpu: 0.0.40
codegen_flags: <defaults>
</compile_context>

<pallas_src>
import jax
import jax.numpy as jnp
from jax.experimental import pallas as pl
from jax.experimental.pallas import tpu as pltpu

NODE_FEAT = 22   # x feature size (EdgeConv mlp hard-codes 3*22)
EDGE_FEAT = 22   # edge_attr feature size
HIDDEN = 32      # hidden_dim
OUT = 1          # critic output channels
_LANE = 128


def _round_up(a, b):
    return (a + b - 1) // b * b


def gnn_critic_kernel(pre_ref,   # [H, TE]  per-edge pre-activation tile (edges on lanes)
                      w2v_ref,   # [H, 1]   (W2 @ wg_h), layer 2 folded into the head
                      v_ref,     # [1,1,1]  partial value for this part
                      acc_ref):  # [H, TE]  f32 scratch: running sum of relu(pre)
    step = pl.program_id(1)

    @pl.when(step == 0)
    def _():
        acc_ref[...] = jnp.zeros_like(acc_ref)

    # Upcast right after load (v5e VPU has no bf16).  Padded edge columns are exact
    # zeros (b1 was folded in before padding), so relu(0)=0 and no mask is needed.
    acc_ref[...] += jnp.maximum(pre_ref[...].astype(jnp.float32), 0.0)

    @pl.when(step == pl.num_programs(1) - 1)
    def _():
        # Head: (sum_e relu(h_e)) . (W2 @ wg_h) — one lane reduce + one sublane reduce.
        col = jnp.sum(acc_ref[...] * w2v_ref[...], axis=1, keepdims=True)   # [H, 1]
        total = jnp.sum(col, axis=0, keepdims=True)                          # [1, 1]
        v_ref[...] = total.reshape(1, 1, 1)


def init_params(key):
    k1, k2, k3, k4, k5, k6 = jax.random.split(key, 6)
    scale = 0.1
    return {
        # stored as [in, out] (transpose of torch Linear.weight)
        "w1": (scale * jax.random.normal(k1, (3 * NODE_FEAT, HIDDEN))).astype(jnp.float32),
        "b1": (scale * jax.random.normal(k2, (HIDDEN,))).astype(jnp.float32),
        "w2": (scale * jax.random.normal(k3, (HIDDEN, HIDDEN))).astype(jnp.float32),
        "b2": (scale * jax.random.normal(k4, (HIDDEN,))).astype(jnp.float32),
        "wg": (scale * jax.random.normal(k5, (NODE_FEAT + HIDDEN, OUT))).astype(jnp.float32),
        "bg": (scale * jax.random.normal(k6, (OUT,))).astype(jnp.float32),
    }


def gnn_critic_forward(x, edge_index, edge_attr, params, *,
                       te_max=2048, num_parts=1, stream_dtype=jnp.bfloat16):
    """Pallas implementation of GNNCritic.forward(x, edge_index, edge_attr)."""
    assert te_max % _LANE == 0
    E = edge_attr.shape[0]

    # PyG MessagePassing with flow='target_to_source':
    #   i = edge_index[0] (x_i, aggregation index), j = edge_index[1] (x_j)
    src_i = edge_index[0]
    dst_j = edge_index[1]

    w1 = params["w1"]                                           # [66, H]
    w1_i, w1_j, w1_e = (w1[:NODE_FEAT], w1[NODE_FEAT:2 * NODE_FEAT],
                        w1[2 * NODE_FEAT:])

    # Per-edge pre-activation of the EdgeConv message MLP with the layer-1 bias
    # folded in.  The tiny matmuls + gathers are left to XLA (O(E*22*H), fuses with
    # the gather); the kernel only streams the result.
    # TODO(synk): when E >> N and the pipeline is HBM-bound, keep xw_i/xw_j resident
    # in VMEM and gather per edge tile in-kernel instead of materializing pre [E,H].
    xw_i = x @ w1_i                                             # [N, H]
    xw_j = x @ w1_j                                             # [N, H]
    pre = xw_i[src_i] + xw_j[dst_j] + edge_attr @ w1_e + params["b1"]   # [E, H]

    # Head folding (aggr='add' => sum over nodes of scatter(msg) == sum over edges):
    #   v = sum_x . wg_x + (sum_e relu(h_e)) . (W2 @ wg_h) + E*(b2 @ wg_h) + bg
    wgx = params["wg"][:NODE_FEAT]                              # [22, OUT]
    wgh = params["wg"][NODE_FEAT:]                              # [H, OUT]
    w2v = (params["w2"] @ wgh).astype(jnp.float32)              # [H, OUT]
    head_const = (jnp.sum(x, axis=0) @ wgx
                  + float(E) * (params["b2"] @ wgh)
                  + params["bg"])                               # [OUT]  (added once, post-kernel)

    # Edge tiling: edges on the lane axis, one tile = [H, te].  Zero padding is
    # harmless (relu(0)=0).  Double-buffered tiles are ~0.5 MB at te=2048 bf16 —
    # far below the scoped-VMEM budget on v5e/v6e/v7x.
    per_part = -(-E // num_parts)
    te = te_max if per_part >= te_max else _round_up(max(per_part, 1), _LANE)
    steps_per_part = -(-per_part // te)
    e_pad = num_parts * steps_per_part * te

    pre_t = jnp.pad(pre.T.astype(stream_dtype), ((0, 0), (0, e_pad - E)))   # [H, e_pad]

    grid = (num_parts, steps_per_part)

    grid_spec = pltpu.PrefetchScalarGridSpec(
        num_scalar_prefetch=0,
        grid=grid,
        in_specs=[
            # TODO(synk): set pipeline_mode=pl.Buffered(3) here if xprof still shows
            # exposed DMA between grid steps after these changes.
            pl.BlockSpec((HIDDEN, te), lambda p, i: (0, p * steps_per_part + i)),
            pl.BlockSpec((HIDDEN, OUT), lambda p, i: (0, 0)),
        ],
        out_specs=pl.BlockSpec((1, 1, 1), lambda p, i: (p, 0, 0)),
        scratch_shapes=[pltpu.VMEM((HIDDEN, te), jnp.float32)],
    )

    partials = pl.pallas_call(
        gnn_critic_kernel,
        out_shape=jax.ShapeDtypeStruct((num_parts, 1, 1), jnp.float32),
        grid_spec=grid_spec,
        compiler_params=pltpu.CompilerParams(
            dimension_semantics=("parallel", "arbitrary")),
    )(pre_t, w2v)

    v = jnp.sum(partials) + head_const                          # [OUT], matches torch shape [1]
    return v.astype(jnp.float32)


def gnn_critic_reference(x, edge_index, edge_attr, params):
    """Pure-JAX reference of the same forward (unfused) for a sanity check."""
    src_i, dst_j = edge_index[0], edge_index[1]
    feat = jnp.concatenate([x[src_i], x[dst_j], edge_attr], axis=1)
    h = jnp.maximum(feat @ params["w1"] + params["b1"], 0.0)
    msg = h @ params["w2"] + params["b2"]
    agg = jax.ops.segment_sum(msg, src_i, num_segments=x.shape[0])
    x_pp = jnp.concatenate([x, agg], axis=1)
    pooled = jnp.sum(x_pp, axis=0)
    return pooled @ params["wg"] + params["bg"]


if __name__ == "__main__":
    key = jax.random.PRNGKey(0)
    k_x, k_ei, k_ea, k_p = jax.random.split(key, 4)
    params = init_params(k_p)

    # Case 1: small graph, f32 stream, single grid step — tight numeric check.
    N, E = 8, 16
    x = jax.random.normal(k_x, (N, NODE_FEAT), dtype=jnp.float32)
    edge_index = jax.random.randint(k_ei, (2, E), 0, N, dtype=jnp.int32)
    edge_attr = jax.random.normal(k_ea, (E, EDGE_FEAT), dtype=jnp.float32)
    v = jax.block_until_ready(
        gnn_critic_forward(x, edge_index, edge_attr, params, stream_dtype=jnp.float32))
    v_ref = gnn_critic_reference(x, edge_index, edge_attr, params)
    assert v.shape == (OUT,)
    assert jnp.allclose(v, v_ref, atol=1e-4, rtol=1e-4), (v, v_ref)

    # Case 2: larger graph, bf16 stream, multi-step edge grid (accumulator + padding).
    N2, E2 = 30, 300
    k_x2, k_ei2, k_ea2 = jax.random.split(k_x, 3)
    x2 = jax.random.normal(k_x2, (N2, NODE_FEAT), dtype=jnp.float32)
    ei2 = jax.random.randint(k_ei2, (2, E2), 0, N2, dtype=jnp.int32)
    ea2 = jax.random.normal(k_ea2, (E2, EDGE_FEAT), dtype=jnp.float32)
    v2 = jax.block_until_ready(gnn_critic_forward(x2, ei2, ea2, params, te_max=128))
    v2_ref = gnn_critic_reference(x2, ei2, ea2, params)
    assert jnp.allclose(v2, v2_ref, atol=1e-1, rtol=5e-2), (v2, v2_ref)

    # Case 3: same graph, 2-way 'parallel' edge split (v7x dual-TensorCore path).
    v3 = jax.block_until_ready(
        gnn_critic_forward(x2, ei2, ea2, params, te_max=128, num_parts=2))
    assert jnp.allclose(v3, v2_ref, atol=1e-1, rtol=5e-2), (v3, v2_ref)
    assert jnp.allclose(v3, v2, atol=1e-2), (v3, v2)

    print("KERNEL_OK")
</pallas_src>

<mosaic_0001>
module attributes {stable_mosaic.version = 11 : i64} {
  func.func @gnn_critic_kernel(%arg0: i32, %arg1: i32, %arg2: memref<32x128xf32, #tpu.memory_space<vmem>>, %arg3: memref<32x1xf32, #tpu.memory_space<vmem>>, %arg4: memref<1x1x1xf32, #tpu.memory_space<vmem>>, %arg5: memref<32x128xf32, #tpu.memory_space<vmem>>) attributes {dimension_semantics = [#tpu.dimension_semantics<parallel>, #tpu.dimension_semantics<arbitrary>], iteration_bounds = array<i64: 1, 1>, scalar_prefetch = 0 : i64, scratch_operands = 1 : i64, tpu.core_type = #tpu.core_type<tc>, window_params = [{transform_indices = @transform_0, window_bounds = array<i64: 32, 128>}, {pipeline_mode = #tpu.pipeline_mode<synchronous>, transform_indices = @transform_1, window_bounds = array<i64: 32, 1>}, {transform_indices = @transform_2, window_bounds = array<i64: 1, 1, 1>}]} {
    %c0_i32 = arith.constant 0 : i32
    %0 = arith.cmpi eq, %arg1, %c0_i32 : i32
    %1 = arith.extui %0 : i1 to i32
    %c0_i32_0 = arith.constant 0 : i32
    %2 = arith.cmpi ne, %1, %c0_i32_0 : i32
    scf.if %2 {
      %cst_8 = arith.constant 0.000000e+00 : f32
      %12 = vector.broadcast %cst_8 : f32 to vector<32x128xf32>
      %c0_9 = arith.constant 0 : index
      %c0_10 = arith.constant 0 : index
      %13 = vector.load %arg5[%c0_9, %c0_10] : memref<32x128xf32, #tpu.memory_space<vmem>>, vector<32x128xf32>
      tpu.vector_store %arg5[%c0_9, %c0_10], %12 {strides = array<i32>} : memref<32x128xf32, #tpu.memory_space<vmem>>, vector<32x128xf32>,
    } else {
    }
    %c0 = arith.constant 0 : index
    %c0_1 = arith.constant 0 : index
    %3 = vector.load %arg5[%c0, %c0_1] : memref<32x128xf32, #tpu.memory_space<vmem>>, vector<32x128xf32>
    %c0_2 = arith.constant 0 : index
    %c0_3 = arith.constant 0 : index
    %4 = vector.load %arg2[%c0_2, %c0_3] : memref<32x128xf32, #tpu.memory_space<vmem>>, vector<32x128xf32>
    %cst = arith.constant 0.000000e+00 : f32
    %5 = vector.broadcast %cst : f32 to vector<32x128xf32>
    %6 = arith.maximumf %4, %5 : vector<32x128xf32>
    %7 = arith.addf %3, %6 : vector<32x128xf32>
    %c0_4 = arith.constant 0 : index
    %c0_5 = arith.constant 0 : index
    %8 = vector.load %arg5[%c0_4, %c0_5] : memref<32x128xf32, #tpu.memory_space<vmem>>, vector<32x128xf32>
    tpu.vector_store %arg5[%c0_4, %c0_5], %7 {strides = array<i32>} : memref<32x128xf32, #tpu.memory_space<vmem>>, vector<32x128xf32>,
    %c0_i32_6 = arith.constant 0 : i32
    %9 = arith.cmpi eq, %arg1, %c0_i32_6 : i32
    %10 = arith.extui %9 : i1 to i32
    %c0_i32_7 = arith.constant 0 : i32
    %11 = arith.cmpi ne, %10, %c0_i32_7 : i32
    scf.if %11 {
      %c0_8 = arith.constant 0 : index
      %c0_9 = arith.constant 0 : index
      %12 = vector.load %arg5[%c0_8, %c0_9] : memref<32x128xf32, #tpu.memory_space<vmem>>, vector<32x128xf32>
      %c0_10 = arith.constant 0 : index
      %c0_11 = arith.constant 0 : index
      %13 = vector.load %arg3[%c0_10, %c0_11] : memref<32x1xf32, #tpu.memory_space<vmem>>, vector<32x1xf32>
      %14 = vector.broadcast %13 : vector<32x1xf32> to vector<32x128xf32>
      %15 = arith.mulf %12, %14 : vector<32x128xf32>
      %cst_12 = arith.constant dense<0.000000e+00> : vector<32xf32>
      %16 = vector.multi_reduction <add>, %15, %cst_12 [1] : vector<32x128xf32> to vector<32xf32>
      %17 = vector.shape_cast %16 : vector<32xf32> to vector<32x1xf32>
      %cst_13 = arith.constant dense<0.000000e+00> : vector<1xf32>
      %18 = vector.multi_reduction <add>, %17, %cst_13 [0] : vector<32x1xf32> to vector<1xf32>
      %19 = vector.shape_cast %18 : vector<1xf32> to vector<1x1xf32>
      %20 = vector.shape_cast %19 : vector<1x1xf32> to vector<1x1x1xf32>
      %c0_14 = arith.constant 0 : index
      %c0_15 = arith.constant 0 : index
      %c0_16 = arith.constant 0 : index
      %21 = vector.load %arg4[%c0_14, %c0_15, %c0_16] : memref<1x1x1xf32, #tpu.memory_space<vmem>>, vector<1x1x1xf32>
      tpu.vector_store %arg4[%c0_14, %c0_15, %c0_16], %20 {strides = array<i32>} : memref<1x1x1xf32, #tpu.memory_space<vmem>>, vector<1x1x1xf32>,
    } else {
    }
    return
  }
  func.func @transform_0(%arg0: i32, %arg1: i32) -> (i32, i32) {
    %c1_i32 = arith.constant 1 : i32
    %0 = arith.muli %arg0, %c1_i32 : i32
    %1 = arith.addi %0, %arg1 : i32
    %c0_i32 = arith.constant 0 : i32
    %c0_i32_0 = arith.constant 0 : i32
    return %c0_i32, %1 : i32, i32
  }
  func.func @transform_1(%arg0: i32, %arg1: i32) -> (i32, i32) {
    %c0_i32 = arith.constant 0 : i32
    %c0_i32_0 = arith.constant 0 : i32
    %c0_i32_1 = arith.constant 0 : i32
    return %c0_i32, %c0_i32_0 : i32, i32
  }
  func.func @transform_2(%arg0: i32, %arg1: i32) -> (i32, i32, i32) {
    %c0_i32 = arith.constant 0 : i32
    %c0_i32_0 = arith.constant 0 : i32
    %c0_i32_1 = arith.constant 0 : i32
    return %arg0, %c0_i32, %c0_i32_0 : i32, i32, i32
  }
}

</mosaic_0001>

<llo_original>
// kernel: tpu_custom_call.1
$region0: #{tpu_custom_call.1}
  #allocation0 [shape = 'u32[]', space=smem, size = 0x4, offset = 0x4, fixed_abs, tag = 'smem constant byte address 0x4 - core index']
  #allocation1 [shape = 'u32[144,128]{1,0:T(1,128)}', space=vmem, size = 0x12000, scoped, tag = 'internal scratch']
  #allocation2 [shape = 'f32[32,128]{1,0:T(8,128)}', space=vmem, size = 0x4000, scoped, tag = 'scratch operand']
  %s0 = inlined_call_operand.vmem [shape: f32[32,128], index: 0, kind: input, shape index: {}]
  %s1 = inlined_call_operand.vmem [shape: f32[32,1], index: 1, kind: input, shape index: {}]
  %s2 = inlined_call_operand.hbm [shape: f32[1,1,1], index: 2, kind: output, shape index: {}]
  %s3 = sld [smem:[#allocation0]]
  $region26: #{tpu_custom_call.1} parent=0
    _
  %s5 = ssub.s32 1, %s3
  %s6 = scalar_select 0, %s5, %s3
  $region1: #{tpu_custom_call.1} parent=0
    #allocation3 [shape = 'u8[512]{0}', space=vmem, size = 0x400, scoped, tag = 'output window, operand 0, single buffered']
    #allocation4 [shape = 's32[1]{0}', space=sflag, size = 0x4, scoped, tag = 'scoped memory for tpu_custom_call.1']
    %7 = vsyncpa [#allocation4], 0
    // Predicated region
    $region2: #{tpu_custom_call.1} parent=1 // pred_check
      _
    $region3: #{tpu_custom_call.1} parent=1 // pred_check_branch
      %9 = sbr.rel (0) target = $region5
    $region4: #{tpu_custom_call.1} parent=1 // pred_region
      %s10 = sadd.s32 0, 0
      %p11 = scmp.lt.s32.totalorder %s10, 0
      %s12 = scalar_select %p11, %s10, 0
      %s13 = smul.addr %s12, 8
      %s14 = scalar_lea.vmem %s0, %s13
      %s15 = sadd.s32 0, 0
    $region5: #{tpu_custom_call.1} parent=1 // pred_fallthru
      _
    // Predicated region
    $region6: #{tpu_custom_call.1} parent=1 // pred_check
      _
    $region7: #{tpu_custom_call.1} parent=1 // pred_check_branch
      %17 = sbr.rel (0) target = $region9
    $region8: #{tpu_custom_call.1} parent=1 // pred_region
      _
    $region9: #{tpu_custom_call.1} parent=1 // pred_fallthru
      _
    %s18 = sadd.s32 0, 0
    %p19 = scmp.lt.s32.totalorder %s18, 0
    %s20 = scalar_select %p19, %s18, 0
    %s21 = smul.addr %s20, 8
    %s22 = scalar_lea.vmem %s0, %s21
    %s23 = sadd.s32 0, 0
    %p24 = scmp.lt.s32.totalorder %s23, 0
    %s25 = scalar_select %p24, %s23, 0
    %s26 = smul.addr %s25, 8
    %s27 = scalar_lea.vmem %s0, %s26
    %s28 = sadd.s32 0, 0
    %p29 = scmp.eq.s32.totalorder 0, 0
    // Predicated region
    $region10: #{tpu_custom_call.1} parent=1 // pred_check
      %p30 = pneg %p29
    $region11: #{tpu_custom_call.1} parent=1 // pred_check_branch
      %32 = sbr.rel (%p30) target = $region13
    $region12: #{tpu_custom_call.1} parent=1 // pred_region
      %33 = vst [vmem:[#allocation2] sm:$0xff] 0.0
      %34 = vst [vmem:[#allocation2 + $0x8] sm:$0xff] 0.0
      %35 = vst [vmem:[#allocation2 + $0x10] sm:$0xff] 0.0
      %36 = vst [vmem:[#allocation2 + $0x18] sm:$0xff] 0.0
    $region13: #{tpu_custom_call.1} parent=1 // pred_fallthru
      _
    %v37 = vld [vmem:[#allocation2] sm:$0xff]
    %v38 = vld [vmem:[#allocation2 + $0x8] sm:$0xff]
    %v39 = vld [vmem:[#allocation2 + $0x10] sm:$0xff]
    %v40 = vld [vmem:[#allocation2 + $0x18] sm:$0xff]
    %v41 = vld [vmem:[%s27] sm:$0xff]
    %v42 = vld [vmem:[%s27 + $0x8] sm:$0xff]
    %v43 = vld [vmem:[%s27 + $0x10] sm:$0xff]
    %v44 = vld [vmem:[%s27 + $0x18] sm:$0xff]
    %v45 = vmax.f32 %v41, 0.0
    %v46 = vmax.f32 %v42, 0.0
    %v47 = vmax.f32 %v43, 0.0
    %v48 = vmax.f32 %v44, 0.0
    %v49 = vadd.f32 %v37, %v45
    %v50 = vadd.f32 %v38, %v46
    %v51 = vadd.f32 %v39, %v47
    %v52 = vadd.f32 %v40, %v48
    %53 = vst [vmem:[#allocation2] sm:$0xff] %v49
    %54 = vst [vmem:[#allocation2 + $0x8] sm:$0xff] %v50
    %55 = vst [vmem:[#allocation2 + $0x10] sm:$0xff] %v51
    %56 = vst [vmem:[#allocation2 + $0x18] sm:$0xff] %v52
    // Predicated region
    $region14: #{tpu_custom_call.1} parent=1 // pred_check
      %p57 = pneg %p29
    $region15: #{tpu_custom_call.1} parent=1 // pred_check_branch
      %59 = sbr.rel (%p57) target = $region17
    $region16: #{tpu_custom_call.1} parent=1 // pred_region
      %v60 = vld [vmem:[#allocation2] sm:$0xff]
      %v61 = vld [vmem:[#allocation2 + $0x8] sm:$0xff]
      %v62 = vld [vmem:[#allocation2 + $0x10] sm:$0xff]
      %v63 = vld [vmem:[#allocation2 + $0x18] sm:$0xff]
      %v64 = vld [vmem:[%s1] sm:$0xff]
      %v65 = vld [vmem:[%s1 + $0x8] sm:$0xff]
      %v66 = vld [vmem:[%s1 + $0x10] sm:$0xff]
      %v67 = vld [vmem:[%s1 + $0x18] sm:$0xff]
      %69 = vset.pattern.permute.xlu0 0
      %70 = vperm.xlu0 %69, %v64
      %v71 = vpop.permute.xlu0 %70
      %74 = vset.pattern.permute.xlu0 0
      %75 = vperm.xlu0 %74, %v65
      %v76 = vpop.permute.xlu0 %75
      %79 = vset.pattern.permute.xlu0 0
      %80 = vperm.xlu0 %79, %v66
      %v81 = vpop.permute.xlu0 %80
      %84 = vset.pattern.permute.xlu0 0
      %85 = vperm.xlu0 %84, %v67
      %v86 = vpop.permute.xlu0 %85
      %v88 = vmul.f32 %v60, %v71
      %v89 = vmul.f32 %v61, %v76
      %v90 = vmul.f32 %v62, %v81
      %v91 = vmul.f32 %v63, %v86
      %92 = vadd.xlane.f32.xlu0 %v88
      %v93 = vpop.xlane.xlu0 %92
      %94 = vadd.xlane.f32.xlu0 %v89
      %v95 = vpop.xlane.xlu0 %94
      %96 = vadd.xlane.f32.xlu0 %v90
      %v97 = vpop.xlane.xlu0 %96
      %98 = vadd.xlane.f32.xlu0 %v91
      %v99 = vpop.xlane.xlu0 %98
      %v100 = vadd.f32 %v93, %v95
      %v101 = vadd.f32 %v100, %v97
      %v102 = vadd.f32 %v101, %v99
      %v103 = vrot.slane %v102, 4
      %v104 = vadd.f32 %v102, %v103
      %v105 = vrot.slane %v104, 2
      %v106 = vadd.f32 %v104, %v105
      %v107 = vrot.slane %v106, 1
      %v108 = vadd.f32 %v106, %v107
      %vm109 = vcmask 0
      %110 = vst.msk [vmem:[#allocation3] sm:$0x1] %vm109, %v108
    $region17: #{tpu_custom_call.1} parent=1 // pred_fallthru
      _
    // Predicated region
    $region18: #{tpu_custom_call.1} parent=1 // pred_check
      _
    $region19: #{tpu_custom_call.1} parent=1 // pred_check_branch
      %112 = sbr.rel (0) target = $region21
    $region20: #{tpu_custom_call.1} parent=1 // pred_region
      %s114 = ssub.s32 16, 16
      %115 = vsyncadd [#allocation4], %s114
      %s117 = sshll.u32 [#allocation3], 4
      %s118 = int_to_ptr.vmem [resolvable:$true] %s117
      %120 = dma.vmem_to_hbm [thread:$0]  %s118, 16, %s2, [#allocation4]
    $region21: #{tpu_custom_call.1} parent=1 // pred_fallthru
      _
    // Predicated region
    $region22: #{tpu_custom_call.1} parent=1 // pred_check
      _
    $region23: #{tpu_custom_call.1} parent=1 // pred_check_branch
      %122 = sbr.rel (0) target = $region25
    $region24: #{tpu_custom_call.1} parent=1 // pred_region
      %123 = dma.done [#allocation4], 16
    $region25: #{tpu_custom_call.1} parent=1 // pred_fallthru
      _
    %124 = vsyncpa [#allocation4], 1

</llo_original>
